<compile_context>
chip_gen: v6e
topology: v6e:2x2x1
jax: 0.10.0
libtpu: 0.0.40
codegen_flags: <defaults>
</compile_context>

<pallas_src>
import functools

import jax
import jax.numpy as jnp
from jax import lax
from jax.experimental import pallas as pl
from jax.experimental.pallas import tpu as pltpu


def _round_up(x, m):
    return (x + m - 1) // m * m


def _embedding_kernel(ctx_ref, rn_ref, wc_ref, wr_ref, out_ref, *,
                      margin, batch, tile_b):
    i = pl.program_id(0)

    # Canonical (M,K)x(K,N) matmuls with f32 accumulation on the MXU.
    cont_rep = jnp.dot(ctx_ref[...], wc_ref[...],
                       preferred_element_type=jnp.float32)      # (T, E_pad)
    rn_rep = jnp.dot(rn_ref[...], wr_ref[...],
                     preferred_element_type=jnp.float32)        # (2T, E_pad)
    resp_rep = rn_rep[:tile_b]                                  # (T, E_pad)
    neg_rep = rn_rep[tile_b:]                                   # (T, E_pad)

    # diag(A @ B.T) == rowwise dot product of the projections.
    f_pos = jnp.sum(cont_rep * resp_rep, axis=-1).reshape(1, tile_b)
    f_neg = jnp.sum(cont_rep * neg_rep, axis=-1).reshape(1, tile_b)

    # Mask padded batch rows out of the loss (they would each add `margin`).
    lane = lax.broadcasted_iota(jnp.int32, (1, tile_b), 1)
    valid = (i * tile_b + lane) < batch
    hinge = jnp.where(valid, jnp.maximum(f_neg - f_pos + margin, 0.0),
                      jnp.float32(0.0))
    part_loss = jnp.sum(hinge)

    # Pack everything into one lane-dense (8, TILE_B) slab:
    #   row 0 = f_pos, row 1 = f_neg, row 2 = per-tile partial loss, rest 0.
    row = lax.broadcasted_iota(jnp.int32, (8, tile_b), 0)
    slab = jnp.where(row == 0, jnp.broadcast_to(f_pos, (8, tile_b)),
           jnp.where(row == 1, jnp.broadcast_to(f_neg, (8, tile_b)),
           jnp.where(row == 2, part_loss, jnp.float32(0.0))))
    out_ref[...] = slab


def embedding_model_forward(context_batch, response_batch, neg_response_batch,
                            context_embedding, response_embedding, margin,
                            *, tile_b=128):
    B, V = context_batch.shape
    E = context_embedding.shape[0]

    B_pad = _round_up(B, tile_b)
    V_pad = _round_up(V, 128)
    E_pad = _round_up(E, 128)
    nt = B_pad // tile_b

    f32 = jnp.float32

    def pad2(x, rows, cols):
        x = x.astype(f32)
        return jnp.pad(x, ((0, rows - x.shape[0]), (0, cols - x.shape[1])))

    ctx_p = pad2(context_batch, B_pad, V_pad)
    resp_p = pad2(response_batch, B_pad, V_pad)
    neg_p = pad2(neg_response_batch, B_pad, V_pad)

    # One-time XLA transpose: weights enter the kernel as (V_pad, E_pad) so the
    # contraction dim is the RHS leading (sublane-major) axis.
    wc_t = pad2(context_embedding.T, V_pad, E_pad)
    wr_t = pad2(response_embedding.T, V_pad, E_pad)

    # Fuse resp + neg: interleave at tile granularity so each grid step reads
    # one contiguous (2*tile_b, V_pad) LHS -> single MXU pass over W_resp.
    rn_p = jnp.concatenate(
        [resp_p.reshape(nt, tile_b, V_pad), neg_p.reshape(nt, tile_b, V_pad)],
        axis=1).reshape(2 * B_pad, V_pad)

    kernel = functools.partial(_embedding_kernel, margin=float(margin),
                               batch=B, tile_b=tile_b)

    slab = pl.pallas_call(
        kernel,
        out_shape=jax.ShapeDtypeStruct((8 * nt, tile_b), jnp.float32),
        grid=(nt,),
        in_specs=[
            pl.BlockSpec((tile_b, V_pad), lambda i: (i, 0)),
            pl.BlockSpec((2 * tile_b, V_pad), lambda i: (i, 0)),
            pl.BlockSpec((V_pad, E_pad), lambda i: (0, 0)),
            pl.BlockSpec((V_pad, E_pad), lambda i: (0, 0)),
        ],
        out_specs=pl.BlockSpec((8, tile_b), lambda i: (i, 0)),
        compiler_params=pltpu.CompilerParams(
            dimension_semantics=("parallel",)),
    )(ctx_p, rn_p, wc_t, wr_t)

    slab = slab.reshape(nt, 8, tile_b)
    f_pos = slab[:, 0, :].reshape(-1)[:B]
    f_neg = slab[:, 1, :].reshape(-1)[:B]
    loss = jnp.sum(slab[:, 2, 0])
    return f_pos, f_neg, loss


def _reference(ctx, resp, neg, wc, wr, margin):
    cont_rep = (wc @ ctx.T).T
    resp_rep = wr @ resp.T
    neg_rep = wr @ neg.T
    f_pos = jnp.diag(cont_rep @ resp_rep)
    f_neg = jnp.diag(cont_rep @ neg_rep)
    loss = jnp.sum(jax.nn.relu(f_neg - f_pos + margin))
    return f_pos, f_neg, loss


if __name__ == "__main__":
    # Small shapes consistent with the module: batch=8, vocab_dim=64, emb_dim=32.
    B, V, E = 8, 64, 32
    margin = 0.5

    key = jax.random.PRNGKey(0)
    k_ctx, k_resp, k_neg, k_wc, k_wr = jax.random.split(key, 5)

    context_batch = jax.random.normal(k_ctx, (B, V), dtype=jnp.float32)
    response_batch = jax.random.normal(k_resp, (B, V), dtype=jnp.float32)
    neg_response_batch = jax.random.normal(k_neg, (B, V), dtype=jnp.float32)

    # Parameters: uniform(-1, 1) (mirrors reset_parameters()).
    context_embedding = jax.random.uniform(k_wc, (E, V), dtype=jnp.float32,
                                           minval=-1.0, maxval=1.0)
    response_embedding = jax.random.uniform(k_wr, (E, V), dtype=jnp.float32,
                                            minval=-1.0, maxval=1.0)

    f_pos, f_neg, loss = embedding_model_forward(
        context_batch, response_batch, neg_response_batch,
        context_embedding, response_embedding, margin)
    jax.block_until_ready((f_pos, f_neg, loss))

    # Sanity check against pure-JAX reference.
    rp, rn, rl = _reference(context_batch, response_batch, neg_response_batch,
                            context_embedding, response_embedding, margin)
    assert jnp.allclose(f_pos, rp, atol=1e-3, rtol=1e-3)
    assert jnp.allclose(f_neg, rn, atol=1e-3, rtol=1e-3)
    assert jnp.allclose(loss, rl, atol=1e-3, rtol=1e-3)

    print("KERNEL_OK")
</pallas_src>

<mosaic_0001>
module attributes {stable_mosaic.version = 11 : i64} {
  func.func @_embedding_kernel(%arg0: i32, %arg1: memref<128x128xf32, #tpu.memory_space<vmem>>, %arg2: memref<256x128xf32, #tpu.memory_space<vmem>>, %arg3: memref<128x128xf32, #tpu.memory_space<vmem>>, %arg4: memref<128x128xf32, #tpu.memory_space<vmem>>, %arg5: memref<8x128xf32, #tpu.memory_space<vmem>>) attributes {dimension_semantics = [#tpu.dimension_semantics<parallel>], iteration_bounds = array<i64: 1>, scalar_prefetch = 0 : i64, scratch_operands = 0 : i64, tpu.core_type = #tpu.core_type<tc>, window_params = [{transform_indices = @transform_0, window_bounds = array<i64: 128, 128>}, {transform_indices = @transform_1, window_bounds = array<i64: 256, 128>}, {pipeline_mode = #tpu.pipeline_mode<synchronous>, transform_indices = @transform_2, window_bounds = array<i64: 128, 128>}, {pipeline_mode = #tpu.pipeline_mode<synchronous>, transform_indices = @transform_3, window_bounds = array<i64: 128, 128>}, {transform_indices = @transform_4, window_bounds = array<i64: 8, 128>}]} {
    %c0 = arith.constant 0 : index
    %c0_0 = arith.constant 0 : index
    %0 = vector.load %arg1[%c0, %c0_0] : memref<128x128xf32, #tpu.memory_space<vmem>>, vector<128x128xf32>
    %c0_1 = arith.constant 0 : index
    %c0_2 = arith.constant 0 : index
    %1 = vector.load %arg3[%c0_1, %c0_2] : memref<128x128xf32, #tpu.memory_space<vmem>>, vector<128x128xf32>
    %cst = arith.constant dense<0.000000e+00> : vector<128x128xf32>
    %2 = tpu.matmul %0, %1, %cst {dimension_numbers = #tpu.dot_dimension_numbers<[1], [0], [0], [1], [0, 0, 1, 1], [], []>} : vector<128x128xf32>, vector<128x128xf32>, vector<128x128xf32> -> vector<128x128xf32>
    %c0_3 = arith.constant 0 : index
    %c0_4 = arith.constant 0 : index
    %3 = vector.load %arg2[%c0_3, %c0_4] : memref<256x128xf32, #tpu.memory_space<vmem>>, vector<256x128xf32>
    %c0_5 = arith.constant 0 : index
    %c0_6 = arith.constant 0 : index
    %4 = vector.load %arg4[%c0_5, %c0_6] : memref<128x128xf32, #tpu.memory_space<vmem>>, vector<128x128xf32>
    %cst_7 = arith.constant dense<0.000000e+00> : vector<256x128xf32>
    %5 = tpu.matmul %3, %4, %cst_7 {dimension_numbers = #tpu.dot_dimension_numbers<[1], [0], [0], [1], [0, 0, 1, 1], [], []>} : vector<256x128xf32>, vector<128x128xf32>, vector<256x128xf32> -> vector<256x128xf32>
    %6 = vector.extract_strided_slice %5 {offsets = [0, 0], sizes = [128, 128], strides = [1, 1]} : vector<256x128xf32> to vector<128x128xf32>
    %7 = vector.extract_strided_slice %5 {offsets = [128, 0], sizes = [128, 128], strides = [1, 1]} : vector<256x128xf32> to vector<128x128xf32>
    %8 = arith.mulf %2, %6 : vector<128x128xf32>
    %cst_8 = arith.constant dense<0.000000e+00> : vector<128xf32>
    %9 = vector.multi_reduction <add>, %8, %cst_8 [1] : vector<128x128xf32> to vector<128xf32>
    %10 = vector.shape_cast %9 : vector<128xf32> to vector<1x128xf32>
    %11 = arith.mulf %2, %7 : vector<128x128xf32>
    %cst_9 = arith.constant dense<0.000000e+00> : vector<128xf32>
    %12 = vector.multi_reduction <add>, %11, %cst_9 [1] : vector<128x128xf32> to vector<128xf32>
    %13 = vector.shape_cast %12 : vector<128xf32> to vector<1x128xf32>
    %14 = tpu.iota {dimensions = array<i32: 1>} : vector<1x128xi32>
    %c128_i32 = arith.constant 128 : i32
    %15 = arith.muli %arg0, %c128_i32 : i32
    %16 = vector.broadcast %15 : i32 to vector<1x128xi32>
    %17 = arith.addi %16, %14 : vector<1x128xi32>
    %c8_i32 = arith.constant 8 : i32
    %18 = vector.broadcast %c8_i32 : i32 to vector<1x128xi32>
    %19 = arith.cmpi slt, %17, %18 : vector<1x128xi32>
    %20 = arith.subf %13, %10 : vector<1x128xf32>
    %cst_10 = arith.constant 5.000000e-01 : f32
    %21 = vector.broadcast %cst_10 : f32 to vector<1x128xf32>
    %22 = arith.addf %20, %21 : vector<1x128xf32>
    %cst_11 = arith.constant 0.000000e+00 : f32
    %23 = vector.broadcast %cst_11 : f32 to vector<1x128xf32>
    %24 = arith.maximumf %22, %23 : vector<1x128xf32>
    %cst_12 = arith.constant 0.000000e+00 : f32
    %25 = vector.broadcast %cst_12 : f32 to vector<1x128xf32>
    %26 = arith.select %19, %24, %25 : vector<1x128xi1>, vector<1x128xf32>
    %27 = vector.shape_cast %26 : vector<1x128xf32> to vector<1x1x128xf32>
    %cst_13 = arith.constant dense<0.000000e+00> : vector<1xf32>
    %28 = vector.multi_reduction <add>, %27, %cst_13 [1, 2] : vector<1x1x128xf32> to vector<1xf32>
    %29 = vector.shape_cast %28 : vector<1xf32> to vector<1x1x1xf32>
    %30 = vector.extract %29[0, 0, 0] : f32 from vector<1x1x1xf32>
    %31 = tpu.iota {dimensions = array<i32: 0>} : vector<8x128xi32>
    %c0_i32 = arith.constant 0 : i32
    %32 = vector.broadcast %c0_i32 : i32 to vector<8x128xi32>
    %33 = arith.cmpi eq, %31, %32 : vector<8x128xi32>
    %34 = vector.shape_cast %10 : vector<1x128xf32> to vector<1x128xf32>
    %35 = vector.broadcast %34 : vector<1x128xf32> to vector<8x128xf32>
    %c1_i32 = arith.constant 1 : i32
    %36 = vector.broadcast %c1_i32 : i32 to vector<8x128xi32>
    %37 = arith.cmpi eq, %31, %36 : vector<8x128xi32>
    %38 = vector.shape_cast %13 : vector<1x128xf32> to vector<1x128xf32>
    %39 = vector.broadcast %38 : vector<1x128xf32> to vector<8x128xf32>
    %c2_i32 = arith.constant 2 : i32
    %40 = vector.broadcast %c2_i32 : i32 to vector<8x128xi32>
    %41 = arith.cmpi eq, %31, %40 : vector<8x128xi32>
    %cst_14 = arith.constant 0.000000e+00 : f32
    %42 = vector.broadcast %30 : f32 to vector<8x128xf32>
    %43 = vector.broadcast %cst_14 : f32 to vector<8x128xf32>
    %44 = arith.select %41, %42, %43 : vector<8x128xi1>, vector<8x128xf32>
    %45 = arith.select %37, %39, %44 : vector<8x128xi1>, vector<8x128xf32>
    %46 = arith.select %33, %35, %45 : vector<8x128xi1>, vector<8x128xf32>
    %c0_15 = arith.constant 0 : index
    %c0_16 = arith.constant 0 : index
    %47 = vector.load %arg5[%c0_15, %c0_16] : memref<8x128xf32, #tpu.memory_space<vmem>>, vector<8x128xf32>
    tpu.vector_store %arg5[%c0_15, %c0_16], %46 {strides = array<i32>} : memref<8x128xf32, #tpu.memory_space<vmem>>, vector<8x128xf32>,
    return
  }
  func.func @transform_0(%arg0: i32) -> (i32, i32) {
    %c0_i32 = arith.constant 0 : i32
    %c0_i32_0 = arith.constant 0 : i32
    return %arg0, %c0_i32 : i32, i32
  }
  func.func @transform_1(%arg0: i32) -> (i32, i32) {
    %c0_i32 = arith.constant 0 : i32
    %c0_i32_0 = arith.constant 0 : i32
    return %arg0, %c0_i32 : i32, i32
  }
  func.func @transform_2(%arg0: i32) -> (i32, i32) {
    %c0_i32 = arith.constant 0 : i32
    %c0_i32_0 = arith.constant 0 : i32
    %c0_i32_1 = arith.constant 0 : i32
    return %c0_i32, %c0_i32_0 : i32, i32
  }
  func.func @transform_3(%arg0: i32) -> (i32, i32) {
    %c0_i32 = arith.constant 0 : i32
    %c0_i32_0 = arith.constant 0 : i32
    %c0_i32_1 = arith.constant 0 : i32
    return %c0_i32, %c0_i32_0 : i32, i32
  }
  func.func @transform_4(%arg0: i32) -> (i32, i32) {
    %c0_i32 = arith.constant 0 : i32
    %c0_i32_0 = arith.constant 0 : i32
    return %arg0, %c0_i32 : i32, i32
  }
}

</mosaic_0001>

<llo_original>
// kernel: tpu_custom_call.1
$region0: #{tpu_custom_call.1}
  #allocation0 [shape = 'u32[]', space=smem, size = 0x4, offset = 0x4, fixed_abs, tag = 'smem constant byte address 0x4 - core index']
  #allocation1 [shape = 'u32[144,128]{1,0:T(1,128)}', space=vmem, size = 0x12000, scoped, tag = 'internal scratch']
  %s0 = inlined_call_operand.hbm [shape: f32[128,128], index: 0, kind: input, shape index: {}]
  %s1 = inlined_call_operand.hbm [shape: f32[256,128], index: 1, kind: input, shape index: {}]
  %s2 = inlined_call_operand.hbm [shape: f32[128,128], index: 2, kind: input, shape index: {}]
  %s3 = inlined_call_operand.hbm [shape: f32[128,128], index: 3, kind: input, shape index: {}]
  %s4 = inlined_call_operand.hbm [shape: f32[8,128], index: 4, kind: output, shape index: {}]
  %s5 = sld [smem:[#allocation0]]
  $region42: #{tpu_custom_call.1} parent=0
    _
  %s7 = ssub.s32 1, %s5
  %s8 = scalar_select 0, %s7, %s5
  $region1: #{tpu_custom_call.1} parent=0
    #allocation2 [shape = 'u8[65536]{0}', space=vmem, size = 0x10000, scoped, tag = 'input window, operand 0, single buffered']
    #allocation3 [shape = 's32[1]{0}', space=sflag, size = 0x4, scoped, tag = 'scoped memory for tpu_custom_call.1']
    #allocation4 [shape = 's32[1]{0}', space=sflag, size = 0x4, scoped, tag = 'scoped memory for tpu_custom_call.1']
    #allocation5 [shape = 'u8[131072]{0}', space=vmem, size = 0x20000, scoped, tag = 'input window, operand 1, single buffered']
    #allocation6 [shape = 's32[1]{0}', space=sflag, size = 0x4, scoped, tag = 'scoped memory for tpu_custom_call.1']
    #allocation7 [shape = 'u8[65536]{0}', space=vmem, size = 0x10000, scoped, tag = 'input window, operand 2, single buffered']
    #allocation8 [shape = 'u8[65536]{0}', space=vmem, size = 0x10000, scoped, tag = 'input window, operand 3, single buffered']
    #allocation9 [shape = 's32[1]{0}', space=sflag, size = 0x4, scoped, tag = 'scoped memory for tpu_custom_call.1']
    #allocation10 [shape = 'u8[4096]{0}', space=vmem, size = 0x1000, scoped, tag = 'output window, operand 0, single buffered']
    %9 = vsyncpa [#allocation3], 0
    %10 = vsyncpa [#allocation6], 0
    %11 = vsyncpa [#allocation9], 0
    %12 = vsyncpa [#allocation4], 0
    // Predicated region
    $region2: #{tpu_custom_call.1} parent=1 // pred_check
      _
    $region3: #{tpu_custom_call.1} parent=1 // pred_check_branch
      %14 = sbr.rel (0) target = $region5
    $region4: #{tpu_custom_call.1} parent=1 // pred_region
      %s16 = ssub.s32 2048, 2048
      %17 = vsyncadd [#allocation3], %s16
      %s18 = sshll.u32 [#allocation2], 4
      %s19 = int_to_ptr.vmem [resolvable:$true] %s18
      %24 = dma.hbm_to_vmem [thread:$0]  %s0, 2048, %s19, [#allocation3], 128, 128, 8
    $region5: #{tpu_custom_call.1} parent=1 // pred_fallthru
      _
    // Predicated region
    $region6: #{tpu_custom_call.1} parent=1 // pred_check
      _
    $region7: #{tpu_custom_call.1} parent=1 // pred_check_branch
      %26 = sbr.rel (0) target = $region9
    $region8: #{tpu_custom_call.1} parent=1 // pred_region
      %s28 = ssub.s32 4096, 4096
      %29 = vsyncadd [#allocation6], %s28
      %s30 = sshll.u32 [#allocation5], 4
      %s31 = int_to_ptr.vmem [resolvable:$true] %s30
      %36 = dma.hbm_to_vmem [thread:$0]  %s1, 4096, %s31, [#allocation6], 128, 128, 8
    $region9: #{tpu_custom_call.1} parent=1 // pred_fallthru
      _
    // Predicated region
    $region10: #{tpu_custom_call.1} parent=1 // pred_check
      _
    $region11: #{tpu_custom_call.1} parent=1 // pred_check_branch
      %38 = sbr.rel (0) target = $region13
    $region12: #{tpu_custom_call.1} parent=1 // pred_region
      %s40 = ssub.s32 2048, 2048
      %41 = vsyncadd [#allocation6], %s40
      %s42 = sshll.u32 [#allocation7], 4
      %s43 = int_to_ptr.vmem [resolvable:$true] %s42
      %48 = dma.hbm_to_vmem [thread:$0]  %s2, 2048, %s43, [#allocation6], 128, 128, 8
    $region13: #{tpu_custom_call.1} parent=1 // pred_fallthru
      _
    // Predicated region
    $region14: #{tpu_custom_call.1} parent=1 // pred_check
      _
    $region15: #{tpu_custom_call.1} parent=1 // pred_check_branch
      %50 = sbr.rel (0) target = $region17
    $region16: #{tpu_custom_call.1} parent=1 // pred_region
      %s52 = ssub.s32 2048, 2048
      %53 = vsyncadd [#allocation9], %s52
      %s54 = sshll.u32 [#allocation8], 4
      %s55 = int_to_ptr.vmem [resolvable:$true] %s54
      %60 = dma.hbm_to_vmem [thread:$0]  %s3, 2048, %s55, [#allocation9], 128, 128, 8
    $region17: #{tpu_custom_call.1} parent=1 // pred_fallthru
      _
    // Predicated region
    $region18: #{tpu_custom_call.1} parent=1 // pred_check
      _
    $region19: #{tpu_custom_call.1} parent=1 // pred_check_branch
      %62 = sbr.rel (0) target = $region21
    $region20: #{tpu_custom_call.1} parent=1 // pred_region
      %63 = dma.done [#allocation3], 2048
    $region21: #{tpu_custom_call.1} parent=1 // pred_fallthru
      _
    // Predicated region
    $region22: #{tpu_custom_call.1} parent=1 // pred_check
      _
    $region23: #{tpu_custom_call.1} parent=1 // pred_check_branch
      %65 = sbr.rel (0) target = $region25
    $region24: #{tpu_custom_call.1} parent=1 // pred_region
      %66 = dma.done [#allocation6], 4096
    $region25: #{tpu_custom_call.1} parent=1 // pred_fallthru
      _
    // Predicated region
    $region26: #{tpu_custom_call.1} parent=1 // pred_check
      _
    $region27: #{tpu_custom_call.1} parent=1 // pred_check_branch
      %68 = sbr.rel (0) target = $region29
    $region28: #{tpu_custom_call.1} parent=1 // pred_region
      %69 = dma.done [#allocation6], 2048
    $region29: #{tpu_custom_call.1} parent=1 // pred_fallthru
      _
    // Predicated region
    $region30: #{tpu_custom_call.1} parent=1 // pred_check
      _
    $region31: #{tpu_custom_call.1} parent=1 // pred_check_branch
      %71 = sbr.rel (0) target = $region33
    $region32: #{tpu_custom_call.1} parent=1 // pred_region
      %72 = dma.done [#allocation9], 2048
    $region33: #{tpu_custom_call.1} parent=1 // pred_fallthru
      _
    %v73 = vld [vmem:[#allocation2] sm:$0xff]
    %v74 = vld [vmem:[#allocation2 + $0x8] sm:$0xff]
    %v75 = vld [vmem:[#allocation2 + $0x10] sm:$0xff]
    %v76 = vld [vmem:[#allocation2 + $0x18] sm:$0xff]
    %v77 = vld [vmem:[#allocation2 + $0x20] sm:$0xff]
    %v78 = vld [vmem:[#allocation2 + $0x28] sm:$0xff]
    %v79 = vld [vmem:[#allocation2 + $0x30] sm:$0xff]
    %v80 = vld [vmem:[#allocation2 + $0x38] sm:$0xff]
    %v81 = vld [vmem:[#allocation2 + $0x40] sm:$0xff]
    %v82 = vld [vmem:[#allocation2 + $0x48] sm:$0xff]
    %v83 = vld [vmem:[#allocation2 + $0x50] sm:$0xff]
    %v84 = vld [vmem:[#allocation2 + $0x58] sm:$0xff]
    %v85 = vld [vmem:[#allocation2 + $0x60] sm:$0xff]
    %v86 = vld [vmem:[#allocation2 + $0x68] sm:$0xff]
    %v87 = vld [vmem:[#allocation2 + $0x70] sm:$0xff]
    %v88 = vld [vmem:[#allocation2 + $0x78] sm:$0xff]
    %v89 = vld [vmem:[#allocation7] sm:$0xff]
    %v90 = vld [vmem:[#allocation7 + $0x8] sm:$0xff]
    %v91 = vld [vmem:[#allocation7 + $0x10] sm:$0xff]
    %v92 = vld [vmem:[#allocation7 + $0x18] sm:$0xff]
    %v93 = vld [vmem:[#allocation7 + $0x20] sm:$0xff]
    %v94 = vld [vmem:[#allocation7 + $0x28] sm:$0xff]
    %v95 = vld [vmem:[#allocation7 + $0x30] sm:$0xff]
    %v96 = vld [vmem:[#allocation7 + $0x38] sm:$0xff]
    %v97 = vld [vmem:[#allocation7 + $0x40] sm:$0xff]
    %v98 = vld [vmem:[#allocation7 + $0x48] sm:$0xff]
    %v99 = vld [vmem:[#allocation7 + $0x50] sm:$0xff]
    %v100 = vld [vmem:[#allocation7 + $0x58] sm:$0xff]
    %v101 = vld [vmem:[#allocation7 + $0x60] sm:$0xff]
    %v102 = vld [vmem:[#allocation7 + $0x68] sm:$0xff]
    %v103 = vld [vmem:[#allocation7 + $0x70] sm:$0xff]
    %v104 = vld [vmem:[#allocation7 + $0x78] sm:$0xff]
    %105 = vmatprep.subr.mxu0 0.0
    %106 = vmatpush1.msra.mxu0 %v104
    %107 = vmatprep.subr.mxu0 0.0
    %108 = vmatpush1.msra.mxu0 %v103
    %109 = vmatprep.subr.mxu0 0.0
    %110 = vmatpush1.msra.mxu0 %v102
    %111 = vmatprep.subr.mxu0 0.0
    %112 = vmatpush1.msra.mxu0 %v101
    %113 = vmatprep.subr.mxu0 0.0
    %114 = vmatpush1.msra.mxu0 %v100
    %115 = vmatprep.subr.mxu0 0.0
    %116 = vmatpush1.msra.mxu0 %v99
    %117 = vmatprep.subr.mxu0 0.0
    %118 = vmatpush1.msra.mxu0 %v98
    %119 = vmatprep.subr.mxu0 0.0
    %120 = vmatpush1.msra.mxu0 %v97
    %121 = vmatprep.subr.mxu0 0.0
    %122 = vmatpush1.msra.mxu0 %v96
    %123 = vmatprep.subr.mxu0 0.0
    %124 = vmatpush1.msra.mxu0 %v95
    %125 = vmatprep.subr.mxu0 0.0
    %126 = vmatpush1.msra.mxu0 %v94
    %127 = vmatprep.subr.mxu0 0.0
    %128 = vmatpush1.msra.mxu0 %v93
    %129 = vmatprep.subr.mxu0 0.0
    %130 = vmatpush1.msra.mxu0 %v92
    %131 = vmatprep.subr.mxu0 0.0
    %132 = vmatpush1.msra.mxu0 %v91
    %133 = vmatprep.subr.mxu0 0.0
    %134 = vmatpush1.msra.mxu0 %v90
    %135 = vmatprep.subr.mxu0 0.0
    %136 = vmatpush1.msra.mxu0 %v89
    %137 = vmatprep.subr.mxu0 0.0
    %138 = vmatpush2.msra.mxu0 0.0
    %139 = vmatprep.subr.mxu0 0.0
    %140 = vmatpush2.msra.mxu0 0.0
    %141 = vmatprep.subr.mxu0 0.0
    %142 = vmatpush2.msra.mxu0 0.0
    %143 = vmatprep.subr.mxu0 0.0
    %144 = vmatpush2.msra.mxu0 0.0
    %145 = vmatprep.subr.mxu0 0.0
    %146 = vmatpush2.msra.mxu0 0.0
    %147 = vmatprep.subr.mxu0 0.0
    %148 = vmatpush2.msra.mxu0 0.0
    %149 = vmatprep.subr.mxu0 0.0
    %150 = vmatpush2.msra.mxu0 0.0
    %151 = vmatprep.subr.mxu0 0.0
    %152 = vmatpush2.msra.mxu0 0.0
    %153 = vmatprep.subr.mxu0 0.0
    %154 = vmatpush2.msra.mxu0 0.0
    %155 = vmatprep.subr.mxu0 0.0
    %156 = vmatpush2.msra.mxu0 0.0
    %157 = vmatprep.subr.mxu0 0.0
    %158 = vmatpush2.msra.mxu0 0.0
    %159 = vmatprep.subr.mxu0 0.0
    %160 = vmatpush2.msra.mxu0 0.0
    %161 = vmatprep.subr.mxu0 0.0
    %162 = vmatpush2.msra.mxu0 0.0
    %163 = vmatprep.subr.mxu0 0.0
    %164 = vmatpush2.msra.mxu0 0.0
    %165 = vmatprep.subr.mxu0 0.0
    %166 = vmatpush2.msra.mxu0 0.0
    %167 = vmatprep.subr.mxu0 0.0
    %168 = vmatpush2.msra.mxu0 0.0
    %169 = vmatprep.mubr.f32.mxu0 0.0
    %170 = vmatmul.mubr.f32.gmra.mxu0 %v73
    %v171 = vpop.f32.mrf.mxu0
    %v172 = vadd.f32 0.0, %v171
    %v173 = vpop.f32.mrf.mxu0
    %174 = vmatprep.mubr.f32.mxu0 0.0
    %175 = vmatmul.mubr.f32.gmra.mxu0 %v74
    %v176 = vpop.f32.mrf.mxu0
    %v177 = vadd.f32 0.0, %v176
    %v178 = vpop.f32.mrf.mxu0
    %179 = vmatprep.mubr.f32.mxu0 0.0
    %180 = vmatmul.mubr.f32.gmra.mxu0 %v75
    %v181 = vpop.f32.mrf.mxu0
    %v182 = vadd.f32 0.0, %v181
    %v183 = vpop.f32.mrf.mxu0
    %184 = vmatprep.mubr.f32.mxu0 0.0
    %185 = vmatmul.mubr.f32.gmra.mxu0 %v76
    %v186 = vpop.f32.mrf.mxu0
    %v187 = vadd.f32 0.0, %v186
    %v188 = vpop.f32.mrf.mxu0
    %189 = vmatprep.mubr.f32.mxu0 0.0
    %190 = vmatmul.mubr.f32.gmra.mxu0 %v77
    %v191 = vpop.f32.mrf.mxu0
    %v192 = vadd.f32 0.0, %v191
    %v193 = vpop.f32.mrf.mxu0
    %194 = vmatprep.mubr.f32.mxu0 0.0
    %195 = vmatmul.mubr.f32.gmra.mxu0 %v78
    %v196 = vpop.f32.mrf.mxu0
    %v197 = vadd.f32 0.0, %v196
    %v198 = vpop.f32.mrf.mxu0
    %199 = vmatprep.mubr.f32.mxu0 0.0
    %200 = vmatmul.mubr.f32.gmra.mxu0 %v79
    %v201 = vpop.f32.mrf.mxu0
    %v202 = vadd.f32 0.0, %v201
    %v203 = vpop.f32.mrf.mxu0
    %204 = vmatprep.mubr.f32.mxu0 0.0
    %205 = vmatmul.mubr.f32.gmra.mxu0 %v80
    %v206 = vpop.f32.mrf.mxu0
    %v207 = vadd.f32 0.0, %v206
    %v208 = vpop.f32.mrf.mxu0
    %209 = vmatprep.mubr.f32.mxu0 0.0
    %210 = vmatmul.mubr.f32.gmra.mxu0 %v81
    %v211 = vpop.f32.mrf.mxu0
    %v212 = vadd.f32 0.0, %v211
    %v213 = vpop.f32.mrf.mxu0
    %214 = vmatprep.mubr.f32.mxu0 0.0
    %215 = vmatmul.mubr.f32.gmra.mxu0 %v82
    %v216 = vpop.f32.mrf.mxu0
    %v217 = vadd.f32 0.0, %v216
    %v218 = vpop.f32.mrf.mxu0
    %219 = vmatprep.mubr.f32.mxu0 0.0
    %220 = vmatmul.mubr.f32.gmra.mxu0 %v83
    %v221 = vpop.f32.mrf.mxu0
    %v222 = vadd.f32 0.0, %v221
    %v223 = vpop.f32.mrf.mxu0
    %224 = vmatprep.mubr.f32.mxu0 0.0
    %225 = vmatmul.mubr.f32.gmra.mxu0 %v84
    %v226 = vpop.f32.mrf.mxu0
    %v227 = vadd.f32 0.0, %v226
    %v228 = vpop.f32.mrf.mxu0
    %229 = vmatprep.mubr.f32.mxu0 0.0
    %230 = vmatmul.mubr.f32.gmra.mxu0 %v85
    %v231 = vpop.f32.mrf.mxu0
    %v232 = vadd.f32 0.0, %v231
    %v233 = vpop.f32.mrf.mxu0
    %234 = vmatprep.mubr.f32.mxu0 0.0
    %235 = vmatmul.mubr.f32.gmra.mxu0 %v86
    %v236 = vpop.f32.mrf.mxu0
    %v237 = vadd.f32 0.0, %v236
    %v238 = vpop.f32.mrf.mxu0
    %239 = vmatprep.mubr.f32.mxu0 0.0
    %240 = vmatmul.mubr.f32.gmra.mxu0 %v87
    %v241 = vpop.f32.mrf.mxu0
    %v242 = vadd.f32 0.0, %v241
    %v243 = vpop.f32.mrf.mxu0
    %244 = vmatprep.mubr.f32.mxu0 0.0
    %245 = vmatmul.mubr.f32.gmra.mxu0 %v88
    %v246 = vpop.f32.mrf.mxu0
    %v247 = vadd.f32 0.0, %v246
    %v248 = vpop.f32.mrf.mxu0
    %249 = vdwg.mxu0
    %v250 = vld [vmem:[#allocation5] sm:$0xff]
    %v251 = vld [vmem:[#allocation5 + $0x8] sm:$0xff]
    %v252 = vld [vmem:[#allocation5 + $0x10] sm:$0xff]
    %v253 = vld [vmem:[#allocation5 + $0x18] sm:$0xff]
    %v254 = vld [vmem:[#allocation5 + $0x20] sm:$0xff]
    %v255 = vld [vmem:[#allocation5 + $0x28] sm:$0xff]
    %v256 = vld [vmem:[#allocation5 + $0x30] sm:$0xff]
    %v257 = vld [vmem:[#allocation5 + $0x38] sm:$0xff]
    %v258 = vld [vmem:[#allocation5 + $0x40] sm:$0xff]
    %v259 = vld [vmem:[#allocation5 + $0x48] sm:$0xff]
    %v260 = vld [vmem:[#allocation5 + $0x50] sm:$0xff]
    %v261 = vld [vmem:[#allocation5 + $0x58] sm:$0xff]
    %v262 = vld [vmem:[#allocation5 + $0x60] sm:$0xff]
    %v263 = vld [vmem:[#allocation5 + $0x68] sm:$0xff]
    %v264 = vld [vmem:[#allocation5 + $0x70] sm:$0xff]
    %v265 = vld [vmem:[#allocation5 + $0x78] sm:$0xff]
    %v266 = vld [vmem:[#allocation5 + $0x80] sm:$0xff]
    %v267 = vld [vmem:[#allocation5 + $0x88] sm:$0xff]
    %v268 = vld [vmem:[#allocation5 + $0x90] sm:$0xff]
    %v269 = vld [vmem:[#allocation5 + $0x98] sm:$0xff]
    %v270 = vld [vmem:[#allocation5 + $0xa0] sm:$0xff]
    %v271 = vld [vmem:[#allocation5 + $0xa8] sm:$0xff]
    %v272 = vld [vmem:[#allocation5 + $0xb0] sm:$0xff]
    %v273 = vld [vmem:[#allocation5 + $0xb8] sm:$0xff]
    %v274 = vld [vmem:[#allocation5 + $0xc0] sm:$0xff]
    %v275 = vld [vmem:[#allocation5 + $0xc8] sm:$0xff]
    %v276 = vld [vmem:[#allocation5 + $0xd0] sm:$0xff]
    %v277 = vld [vmem:[#allocation5 + $0xd8] sm:$0xff]
    %v278 = vld [vmem:[#allocation5 + $0xe0] sm:$0xff]
    %v279 = vld [vmem:[#allocation5 + $0xe8] sm:$0xff]
    %v280 = vld [vmem:[#allocation5 + $0xf0] sm:$0xff]
    %v281 = vld [vmem:[#allocation5 + $0xf8] sm:$0xff]
    %v282 = vld [vmem:[#allocation8] sm:$0xff]
    %v283 = vld [vmem:[#allocation8 + $0x8] sm:$0xff]
    %v284 = vld [vmem:[#allocation8 + $0x10] sm:$0xff]
    %v285 = vld [vmem:[#allocation8 + $0x18] sm:$0xff]
    %v286 = vld [vmem:[#allocation8 + $0x20] sm:$0xff]
    %v287 = vld [vmem:[#allocation8 + $0x28] sm:$0xff]
    %v288 = vld [vmem:[#allocation8 + $0x30] sm:$0xff]
    %v289 = vld [vmem:[#allocation8 + $0x38] sm:$0xff]
    %v290 = vld [vmem:[#allocation8 + $0x40] sm:$0xff]
    %v291 = vld [vmem:[#allocation8 + $0x48] sm:$0xff]
    %v292 = vld [vmem:[#allocation8 + $0x50] sm:$0xff]
    %v293 = vld [vmem:[#allocation8 + $0x58] sm:$0xff]
    %v294 = vld [vmem:[#allocation8 + $0x60] sm:$0xff]
    %v295 = vld [vmem:[#allocation8 + $0x68] sm:$0xff]
    %v296 = vld [vmem:[#allocation8 + $0x70] sm:$0xff]
    %v297 = vld [vmem:[#allocation8 + $0x78] sm:$0xff]
    %298 = vmatprep.subr.mxu0 0.0
    %299 = vmatpush1.msra.mxu0 %v297
    %300 = vmatprep.subr.mxu0 0.0
    %301 = vmatpush1.msra.mxu0 %v296
    %302 = vmatprep.subr.mxu0 0.0
    %303 = vmatpush1.msra.mxu0 %v295
    %304 = vmatprep.subr.mxu0 0.0
    %305 = vmatpush1.msra.mxu0 %v294
    %306 = vmatprep.subr.mxu0 0.0
    %307 = vmatpush1.msra.mxu0 %v293
    %308 = vmatprep.subr.mxu0 0.0
    %309 = vmatpush1.msra.mxu0 %v292
    %310 = vmatprep.subr.mxu0 0.0
    %311 = vmatpush1.msra.mxu0 %v291
    %312 = vmatprep.subr.mxu0 0.0
    %313 = vmatpush1.msra.mxu0 %v290
    %314 = vmatprep.subr.mxu0 0.0
    %315 = vmatpush1.msra.mxu0 %v289
    %316 = vmatprep.subr.mxu0 0.0
    %317 = vmatpush1.msra.mxu0 %v288
    %318 = vmatprep.subr.mxu0 0.0
    %319 = vmatpush1.msra.mxu0 %v287
    %320 = vmatprep.subr.mxu0 0.0
    %321 = vmatpush1.msra.mxu0 %v286
    %322 = vmatprep.subr.mxu0 0.0
    %323 = vmatpush1.msra.mxu0 %v285
    %324 = vmatprep.subr.mxu0 0.0
    %325 = vmatpush1.msra.mxu0 %v284
    %326 = vmatprep.subr.mxu0 0.0
    %327 = vmatpush1.msra.mxu0 %v283
    %328 = vmatprep.subr.mxu0 0.0
    %329 = vmatpush1.msra.mxu0 %v282
    %330 = vmatprep.subr.mxu0 0.0
    %331 = vmatpush2.msra.mxu0 0.0
    %332 = vmatprep.subr.mxu0 0.0
    %333 = vmatpush2.msra.mxu0 0.0
    %334 = vmatprep.subr.mxu0 0.0
    %335 = vmatpush2.msra.mxu0 0.0
    %336 = vmatprep.subr.mxu0 0.0
    %337 = vmatpush2.msra.mxu0 0.0
    %338 = vmatprep.subr.mxu0 0.0
    %339 = vmatpush2.msra.mxu0 0.0
    %340 = vmatprep.subr.mxu0 0.0
    %341 = vmatpush2.msra.mxu0 0.0
    %342 = vmatprep.subr.mxu0 0.0
    %343 = vmatpush2.msra.mxu0 0.0
    %344 = vmatprep.subr.mxu0 0.0
    %345 = vmatpush2.msra.mxu0 0.0
    %346 = vmatprep.subr.mxu0 0.0
    %347 = vmatpush2.msra.mxu0 0.0
    %348 = vmatprep.subr.mxu0 0.0
    %349 = vmatpush2.msra.mxu0 0.0
    %350 = vmatprep.subr.mxu0 0.0
    %351 = vmatpush2.msra.mxu0 0.0
    %352 = vmatprep.subr.mxu0 0.0
    %353 = vmatpush2.msra.mxu0 0.0
    %354 = vmatprep.subr.mxu0 0.0
    %355 = vmatpush2.msra.mxu0 0.0
    %356 = vmatprep.subr.mxu0 0.0
    %357 = vmatpush2.msra.mxu0 0.0
    %358 = vmatprep.subr.mxu0 0.0
    %359 = vmatpush2.msra.mxu0 0.0
    %360 = vmatprep.subr.mxu0 0.0
    %361 = vmatpush2.msra.mxu0 0.0
    %362 = vmatprep.mubr.f32.mxu0 0.0
    %363 = vmatmul.mubr.f32.gmra.mxu0 %v250
    %v364 = vpop.f32.mrf.mxu0
    %v365 = vadd.f32 0.0, %v364
    %v366 = vpop.f32.mrf.mxu0
    %367 = vmatprep.mubr.f32.mxu0 0.0
    %368 = vmatmul.mubr.f32.gmra.mxu0 %v251
    %v369 = vpop.f32.mrf.mxu0
    %v370 = vadd.f32 0.0, %v369
    %v371 = vpop.f32.mrf.mxu0
    %372 = vmatprep.mubr.f32.mxu0 0.0
    %373 = vmatmul.mubr.f32.gmra.mxu0 %v252
    %v374 = vpop.f32.mrf.mxu0
    %v375 = vadd.f32 0.0, %v374
    %v376 = vpop.f32.mrf.mxu0
    %377 = vmatprep.mubr.f32.mxu0 0.0
    %378 = vmatmul.mubr.f32.gmra.mxu0 %v253
    %v379 = vpop.f32.mrf.mxu0
    %v380 = vadd.f32 0.0, %v379
    %v381 = vpop.f32.mrf.mxu0
    %382 = vmatprep.mubr.f32.mxu0 0.0
    %383 = vmatmul.mubr.f32.gmra.mxu0 %v254
    %v384 = vpop.f32.mrf.mxu0
    %v385 = vadd.f32 0.0, %v384
    %v386 = vpop.f32.mrf.mxu0
    %387 = vmatprep.mubr.f32.mxu0 0.0
    %388 = vmatmul.mubr.f32.gmra.mxu0 %v255
    %v389 = vpop.f32.mrf.mxu0
    %v390 = vadd.f32 0.0, %v389
    %v391 = vpop.f32.mrf.mxu0
    %392 = vmatprep.mubr.f32.mxu0 0.0
    %393 = vmatmul.mubr.f32.gmra.mxu0 %v256
    %v394 = vpop.f32.mrf.mxu0
    %v395 = vadd.f32 0.0, %v394
    %v396 = vpop.f32.mrf.mxu0
    %397 = vmatprep.mubr.f32.mxu0 0.0
    %398 = vmatmul.mubr.f32.gmra.mxu0 %v257
    %v399 = vpop.f32.mrf.mxu0
    %v400 = vadd.f32 0.0, %v399
    %v401 = vpop.f32.mrf.mxu0
    %402 = vmatprep.mubr.f32.mxu0 0.0
    %403 = vmatmul.mubr.f32.gmra.mxu0 %v258
    %v404 = vpop.f32.mrf.mxu0
    %v405 = vadd.f32 0.0, %v404
    %v406 = vpop.f32.mrf.mxu0
    %407 = vmatprep.mubr.f32.mxu0 0.0
    %408 = vmatmul.mubr.f32.gmra.mxu0 %v259
    %v409 = vpop.f32.mrf.mxu0
    %v410 = vadd.f32 0.0, %v409
    %v411 = vpop.f32.mrf.mxu0
    %412 = vmatprep.mubr.f32.mxu0 0.0
    %413 = vmatmul.mubr.f32.gmra.mxu0 %v260
    %v414 = vpop.f32.mrf.mxu0
    %v415 = vadd.f32 0.0, %v414
    %v416 = vpop.f32.mrf.mxu0
    %417 = vmatprep.mubr.f32.mxu0 0.0
    %418 = vmatmul.mubr.f32.gmra.mxu0 %v261
    %v419 = vpop.f32.mrf.mxu0
    %v420 = vadd.f32 0.0, %v419
    %v421 = vpop.f32.mrf.mxu0
    %422 = vmatprep.mubr.f32.mxu0 0.0
    %423 = vmatmul.mubr.f32.gmra.mxu0 %v262
    %v424 = vpop.f32.mrf.mxu0
    %v425 = vadd.f32 0.0, %v424
    %v426 = vpop.f32.mrf.mxu0
    %427 = vmatprep.mubr.f32.mxu0 0.0
    %428 = vmatmul.mubr.f32.gmra.mxu0 %v263
    %v429 = vpop.f32.mrf.mxu0
    %v430 = vadd.f32 0.0, %v429
    %v431 = vpop.f32.mrf.mxu0
    %432 = vmatprep.mubr.f32.mxu0 0.0
    %433 = vmatmul.mubr.f32.gmra.mxu0 %v264
    %v434 = vpop.f32.mrf.mxu0
    %v435 = vadd.f32 0.0, %v434
    %v436 = vpop.f32.mrf.mxu0
    %437 = vmatprep.mubr.f32.mxu0 0.0
    %438 = vmatmul.mubr.f32.gmra.mxu0 %v265
    %v439 = vpop.f32.mrf.mxu0
    %v440 = vadd.f32 0.0, %v439
    %v441 = vpop.f32.mrf.mxu0
    %442 = vmatprep.mubr.f32.mxu0 0.0
    %443 = vmatmul.mubr.f32.gmra.mxu0 %v266
    %v444 = vpop.f32.mrf.mxu0
    %v445 = vadd.f32 0.0, %v444
    %v446 = vpop.f32.mrf.mxu0
    %447 = vmatprep.mubr.f32.mxu0 0.0
    %448 = vmatmul.mubr.f32.gmra.mxu0 %v267
    %v449 = vpop.f32.mrf.mxu0
    %v450 = vadd.f32 0.0, %v449
    %v451 = vpop.f32.mrf.mxu0
    %452 = vmatprep.mubr.f32.mxu0 0.0
    %453 = vmatmul.mubr.f32.gmra.mxu0 %v268
    %v454 = vpop.f32.mrf.mxu0
    %v455 = vadd.f32 0.0, %v454
    %v456 = vpop.f32.mrf.mxu0
    %457 = vmatprep.mubr.f32.mxu0 0.0
    %458 = vmatmul.mubr.f32.gmra.mxu0 %v269
    %v459 = vpop.f32.mrf.mxu0
    %v460 = vadd.f32 0.0, %v459
    %v461 = vpop.f32.mrf.mxu0
    %462 = vmatprep.mubr.f32.mxu0 0.0
    %463 = vmatmul.mubr.f32.gmra.mxu0 %v270
    %v464 = vpop.f32.mrf.mxu0
    %v465 = vadd.f32 0.0, %v464
    %v466 = vpop.f32.mrf.mxu0
    %467 = vmatprep.mubr.f32.mxu0 0.0
    %468 = vmatmul.mubr.f32.gmra.mxu0 %v271
    %v469 = vpop.f32.mrf.mxu0
    %v470 = vadd.f32 0.0, %v469
    %v471 = vpop.f32.mrf.mxu0
    %472 = vmatprep.mubr.f32.mxu0 0.0
    %473 = vmatmul.mubr.f32.gmra.mxu0 %v272
    %v474 = vpop.f32.mrf.mxu0
    %v475 = vadd.f32 0.0, %v474
    %v476 = vpop.f32.mrf.mxu0
    %477 = vmatprep.mubr.f32.mxu0 0.0
    %478 = vmatmul.mubr.f32.gmra.mxu0 %v273
    %v479 = vpop.f32.mrf.mxu0
    %v480 = vadd.f32 0.0, %v479
    %v481 = vpop.f32.mrf.mxu0
    %482 = vmatprep.mubr.f32.mxu0 0.0
    %483 = vmatmul.mubr.f32.gmra.mxu0 %v274
    %v484 = vpop.f32.mrf.mxu0
    %v485 = vadd.f32 0.0, %v484
    %v486 = vpop.f32.mrf.mxu0
    %487 = vmatprep.mubr.f32.mxu0 0.0
    %488 = vmatmul.mubr.f32.gmra.mxu0 %v275
    %v489 = vpop.f32.mrf.mxu0
    %v490 = vadd.f32 0.0, %v489
    %v491 = vpop.f32.mrf.mxu0
    %492 = vmatprep.mubr.f32.mxu0 0.0
    %493 = vmatmul.mubr.f32.gmra.mxu0 %v276
    %v494 = vpop.f32.mrf.mxu0
    %v495 = vadd.f32 0.0, %v494
    %v496 = vpop.f32.mrf.mxu0
    %497 = vmatprep.mubr.f32.mxu0 0.0
    %498 = vmatmul.mubr.f32.gmra.mxu0 %v277
    %v499 = vpop.f32.mrf.mxu0
    %v500 = vadd.f32 0.0, %v499
    %v501 = vpop.f32.mrf.mxu0
    %502 = vmatprep.mubr.f32.mxu0 0.0
    %503 = vmatmul.mubr.f32.gmra.mxu0 %v278
    %v504 = vpop.f32.mrf.mxu0
    %v505 = vadd.f32 0.0, %v504
    %v506 = vpop.f32.mrf.mxu0
    %507 = vmatprep.mubr.f32.mxu0 0.0
    %508 = vmatmul.mubr.f32.gmra.mxu0 %v279
    %v509 = vpop.f32.mrf.mxu0
    %v510 = vadd.f32 0.0, %v509
    %v511 = vpop.f32.mrf.mxu0
    %512 = vmatprep.mubr.f32.mxu0 0.0
    %513 = vmatmul.mubr.f32.gmra.mxu0 %v280
    %v514 = vpop.f32.mrf.mxu0
    %v515 = vadd.f32 0.0, %v514
    %v516 = vpop.f32.mrf.mxu0
    %517 = vmatprep.mubr.f32.mxu0 0.0
    %518 = vmatmul.mubr.f32.gmra.mxu0 %v281
    %v519 = vpop.f32.mrf.mxu0
    %v520 = vadd.f32 0.0, %v519
    %v521 = vpop.f32.mrf.mxu0
    %522 = vdwg.mxu0
    %v523 = vmul.f32 %v172, %v365
    %v524 = vmul.f32 %v177, %v370
    %v525 = vmul.f32 %v182, %v375
    %v526 = vmul.f32 %v187, %v380
    %v527 = vmul.f32 %v192, %v385
    %v528 = vmul.f32 %v197, %v390
    %v529 = vmul.f32 %v202, %v395
    %v530 = vmul.f32 %v207, %v400
    %v531 = vmul.f32 %v212, %v405
    %v532 = vmul.f32 %v217, %v410
    %v533 = vmul.f32 %v222, %v415
    %v534 = vmul.f32 %v227, %v420
    %v535 = vmul.f32 %v232, %v425
    %v536 = vmul.f32 %v237, %v430
    %v537 = vmul.f32 %v242, %v435
    %v538 = vmul.f32 %v247, %v440
    %539 = vadd.xlane.f32.xlu0 %v523
    %v540 = vpop.xlane.xlu0 %539
    %541 = vadd.xlane.f32.xlu0 %v524
    %v542 = vpop.xlane.xlu0 %541
    %543 = vadd.xlane.f32.xlu0 %v525
    %v544 = vpop.xlane.xlu0 %543
    %545 = vadd.xlane.f32.xlu0 %v526
    %v546 = vpop.xlane.xlu0 %545
    %547 = vadd.xlane.f32.xlu0 %v527
    %v548 = vpop.xlane.xlu0 %547
    %549 = vadd.xlane.f32.xlu0 %v528
    %v550 = vpop.xlane.xlu0 %549
    %551 = vadd.xlane.f32.xlu0 %v529
    %v552 = vpop.xlane.xlu0 %551
    %553 = vadd.xlane.f32.xlu0 %v530
    %v554 = vpop.xlane.xlu0 %553
    %555 = vadd.xlane.f32.xlu0 %v531
    %v556 = vpop.xlane.xlu0 %555
    %557 = vadd.xlane.f32.xlu0 %v532
    %v558 = vpop.xlane.xlu0 %557
    %559 = vadd.xlane.f32.xlu0 %v533
    %v560 = vpop.xlane.xlu0 %559
    %561 = vadd.xlane.f32.xlu0 %v534
    %v562 = vpop.xlane.xlu0 %561
    %563 = vadd.xlane.f32.xlu0 %v535
    %v564 = vpop.xlane.xlu0 %563
    %565 = vadd.xlane.f32.xlu0 %v536
    %v566 = vpop.xlane.xlu0 %565
    %567 = vadd.xlane.f32.xlu0 %v537
    %v568 = vpop.xlane.xlu0 %567
    %569 = vadd.xlane.f32.xlu0 %v538
    %v570 = vpop.xlane.xlu0 %569
    %v571 = vmul.f32 %v172, %v445
    %v572 = vmul.f32 %v177, %v450
    %v573 = vmul.f32 %v182, %v455
    %v574 = vmul.f32 %v187, %v460
    %v575 = vmul.f32 %v192, %v465
    %v576 = vmul.f32 %v197, %v470
    %v577 = vmul.f32 %v202, %v475
    %v578 = vmul.f32 %v207, %v480
    %v579 = vmul.f32 %v212, %v485
    %v580 = vmul.f32 %v217, %v490
    %v581 = vmul.f32 %v222, %v495
    %v582 = vmul.f32 %v227, %v500
    %v583 = vmul.f32 %v232, %v505
    %v584 = vmul.f32 %v237, %v510
    %v585 = vmul.f32 %v242, %v515
    %v586 = vmul.f32 %v247, %v520
    %587 = vadd.xlane.f32.xlu0 %v571
    %v588 = vpop.xlane.xlu0 %587
    %589 = vadd.xlane.f32.xlu0 %v572
    %v590 = vpop.xlane.xlu0 %589
    %591 = vadd.xlane.f32.xlu0 %v573
    %v592 = vpop.xlane.xlu0 %591
    %593 = vadd.xlane.f32.xlu0 %v574
    %v594 = vpop.xlane.xlu0 %593
    %595 = vadd.xlane.f32.xlu0 %v575
    %v596 = vpop.xlane.xlu0 %595
    %597 = vadd.xlane.f32.xlu0 %v576
    %v598 = vpop.xlane.xlu0 %597
    %599 = vadd.xlane.f32.xlu0 %v577
    %v600 = vpop.xlane.xlu0 %599
    %601 = vadd.xlane.f32.xlu0 %v578
    %v602 = vpop.xlane.xlu0 %601
    %603 = vadd.xlane.f32.xlu0 %v579
    %v604 = vpop.xlane.xlu0 %603
    %605 = vadd.xlane.f32.xlu0 %v580
    %v606 = vpop.xlane.xlu0 %605
    %607 = vadd.xlane.f32.xlu0 %v581
    %v608 = vpop.xlane.xlu0 %607
    %609 = vadd.xlane.f32.xlu0 %v582
    %v610 = vpop.xlane.xlu0 %609
    %611 = vadd.xlane.f32.xlu0 %v583
    %v612 = vpop.xlane.xlu0 %611
    %613 = vadd.xlane.f32.xlu0 %v584
    %v614 = vpop.xlane.xlu0 %613
    %615 = vadd.xlane.f32.xlu0 %v585
    %v616 = vpop.xlane.xlu0 %615
    %617 = vadd.xlane.f32.xlu0 %v586
    %v618 = vpop.xlane.xlu0 %617
    %v619 = vlaneseq
    %v620 = vand.u32 %v619, 127
    %s621 = smul.u32 0, 128
    %v622 = vstv %s621
    %v623 = vadd.s32 %v622, %v620
    %vm624 = vcmp.lt.s32.totalorder %v623, 8
    %v625 = vsub.f32 %v588, %v540
    %v626 = vsub.f32 %v590, %v542
    %v627 = vsub.f32 %v592, %v544
    %v628 = vsub.f32 %v594, %v546
    %v629 = vsub.f32 %v596, %v548
    %v630 = vsub.f32 %v598, %v550
    %v631 = vsub.f32 %v600, %v552
    %v632 = vsub.f32 %v602, %v554
    %v633 = vsub.f32 %v604, %v556
    %v634 = vsub.f32 %v606, %v558
    %v635 = vsub.f32 %v608, %v560
    %v636 = vsub.f32 %v610, %v562
    %v637 = vsub.f32 %v612, %v564
    %v638 = vsub.f32 %v614, %v566
    %v639 = vsub.f32 %v616, %v568
    %v640 = vsub.f32 %v618, %v570
    %v641 = vadd.f32 %v625, 0.5
    %v642 = vadd.f32 %v626, 0.5
    %v643 = vadd.f32 %v627, 0.5
    %v644 = vadd.f32 %v628, 0.5
    %v645 = vadd.f32 %v629, 0.5
    %v646 = vadd.f32 %v630, 0.5
    %v647 = vadd.f32 %v631, 0.5
    %v648 = vadd.f32 %v632, 0.5
    %v649 = vadd.f32 %v633, 0.5
    %v650 = vadd.f32 %v634, 0.5
    %v651 = vadd.f32 %v635, 0.5
    %v652 = vadd.f32 %v636, 0.5
    %v653 = vadd.f32 %v637, 0.5
    %v654 = vadd.f32 %v638, 0.5
    %v655 = vadd.f32 %v639, 0.5
    %v656 = vadd.f32 %v640, 0.5
    %v657 = vmax.f32 %v641, 0.0
    %v658 = vmax.f32 %v642, 0.0
    %v659 = vmax.f32 %v643, 0.0
    %v660 = vmax.f32 %v644, 0.0
    %v661 = vmax.f32 %v645, 0.0
    %v662 = vmax.f32 %v646, 0.0
    %v663 = vmax.f32 %v647, 0.0
    %v664 = vmax.f32 %v648, 0.0
    %v665 = vmax.f32 %v649, 0.0
    %v666 = vmax.f32 %v650, 0.0
    %v667 = vmax.f32 %v651, 0.0
    %v668 = vmax.f32 %v652, 0.0
    %v669 = vmax.f32 %v653, 0.0
    %v670 = vmax.f32 %v654, 0.0
    %v671 = vmax.f32 %v655, 0.0
    %v672 = vmax.f32 %v656, 0.0
    %v689 = vlaneseq
    %v690 = vshrl.u32 %v689, 7
    %v691 = vsub.s32 %v620, %v690
    %v692 = vrot.slane %v657, %v691
    %v693 = vadd.s32 %v620, 4294967288
    %v694 = vlaneseq
    %v695 = vshrl.u32 %v694, 7
    %v696 = vsub.s32 %v693, %v695
    %v697 = vrot.slane %v658, %v696
    %vm698 = vcmask 130112
    %v699 = vsel %vm698, %v697, %v692
    %v700 = vadd.s32 %v620, 4294967280
    %v701 = vlaneseq
    %v702 = vshrl.u32 %v701, 7
    %v703 = vsub.s32 %v700, %v702
    %v704 = vrot.slane %v659, %v703
    %vm705 = vcmask 195712
    %v706 = vsel %vm705, %v704, %v699
    %v707 = vadd.s32 %v620, 4294967272
    %v708 = vlaneseq
    %v709 = vshrl.u32 %v708, 7
    %v710 = vsub.s32 %v707, %v709
    %v711 = vrot.slane %v660, %v710
    %vm712 = vcmask 261312
    %v713 = vsel %vm712, %v711, %v706
    %v714 = vadd.s32 %v620, 4294967264
    %v715 = vlaneseq
    %v716 = vshrl.u32 %v715, 7
    %v717 = vsub.s32 %v714, %v716
    %v718 = vrot.slane %v661, %v717
    %vm719 = vcmask 326912
    %v720 = vsel %vm719, %v718, %v713
    %v721 = vadd.s32 %v620, 4294967256
    %v722 = vlaneseq
    %v723 = vshrl.u32 %v722, 7
    %v724 = vsub.s32 %v721, %v723
    %v725 = vrot.slane %v662, %v724
    %vm726 = vcmask 392512
    %v727 = vsel %vm726, %v725, %v720
    %v728 = vadd.s32 %v620, 4294967248
    %v729 = vlaneseq
    %v730 = vshrl.u32 %v729, 7
    %v731 = vsub.s32 %v728, %v730
    %v732 = vrot.slane %v663, %v731
    %vm733 = vcmask 458112
    %v734 = vsel %vm733, %v732, %v727
    %v735 = vadd.s32 %v620, 4294967240
    %v736 = vlaneseq
    %v737 = vshrl.u32 %v736, 7
    %v738 = vsub.s32 %v735, %v737
    %v739 = vrot.slane %v664, %v738
    %vm740 = vcmask 523712
    %v741 = vsel %vm740, %v739, %v734
    %v742 = vadd.s32 %v620, 4294967232
    %v743 = vlaneseq
    %v744 = vshrl.u32 %v743, 7
    %v745 = vsub.s32 %v742, %v744
    %v746 = vrot.slane %v665, %v745
    %vm747 = vcmask 589312
    %v748 = vsel %vm747, %v746, %v741
    %v749 = vadd.s32 %v620, 4294967224
    %v750 = vlaneseq
    %v751 = vshrl.u32 %v750, 7
    %v752 = vsub.s32 %v749, %v751
    %v753 = vrot.slane %v666, %v752
    %vm754 = vcmask 654912
    %v755 = vsel %vm754, %v753, %v748
    %v756 = vadd.s32 %v620, 4294967216
    %v757 = vlaneseq
    %v758 = vshrl.u32 %v757, 7
    %v759 = vsub.s32 %v756, %v758
    %v760 = vrot.slane %v667, %v759
    %vm761 = vcmask 720512
    %v762 = vsel %vm761, %v760, %v755
    %v763 = vadd.s32 %v620, 4294967208
    %v764 = vlaneseq
    %v765 = vshrl.u32 %v764, 7
    %v766 = vsub.s32 %v763, %v765
    %v767 = vrot.slane %v668, %v766
    %vm768 = vcmask 786112
    %v769 = vsel %vm768, %v767, %v762
    %v770 = vadd.s32 %v620, 4294967200
    %v771 = vlaneseq
    %v772 = vshrl.u32 %v771, 7
    %v773 = vsub.s32 %v770, %v772
    %v774 = vrot.slane %v669, %v773
    %vm775 = vcmask 851712
    %v776 = vsel %vm775, %v774, %v769
    %v777 = vadd.s32 %v620, 4294967192
    %v778 = vlaneseq
    %v779 = vshrl.u32 %v778, 7
    %v780 = vsub.s32 %v777, %v779
    %v781 = vrot.slane %v670, %v780
    %vm782 = vcmask 917312
    %v783 = vsel %vm782, %v781, %v776
    %v784 = vadd.s32 %v620, 4294967184
    %v785 = vlaneseq
    %v786 = vshrl.u32 %v785, 7
    %v787 = vsub.s32 %v784, %v786
    %v788 = vrot.slane %v671, %v787
    %vm789 = vcmask 982912
    %v790 = vsel %vm789, %v788, %v783
    %v791 = vadd.s32 %v620, 4294967176
    %v792 = vlaneseq
    %v793 = vshrl.u32 %v792, 7
    %v794 = vsub.s32 %v791, %v793
    %v795 = vrot.slane %v672, %v794
    %vm796 = vcmask 1048512
    %v797 = vsel %vm796, %v795, %v790
    %v799 = vsel %vm624, %v797, 0.0
    %vm800 = vcmask 1040384
    %v801 = vsel %vm800, %v799, 0.0
    %802 = vadd.xlane.f32.xlu0 %v801
    %v803 = vpop.xlane.xlu0 %802
    %v804 = vrot.slane %v803, 4
    %v805 = vadd.f32 %v803, %v804
    %v806 = vrot.slane %v805, 2
    %v807 = vadd.f32 %v805, %v806
    %v808 = vrot.slane %v807, 1
    %v809 = vadd.f32 %v807, %v808
    %s810 = vtos %v809
    %v811 = vlaneseq
    %v812 = vshrl.u32 %v811, 7
    %vm813 = vcmp.eq.s32.totalorder %v812, 0
    %vm814 = vcmp.eq.s32.totalorder %v812, 1
    %vm815 = vcmp.eq.s32.totalorder %v812, 2
    %v816 = vstv %s810
    %v817 = vsel %vm815, %v816, 0.0
    %v834 = vlaneseq
    %v835 = vshrl.u32 %v834, 7
    %v836 = vsub.s32 %v620, %v835
    %v837 = vrot.slane %v588, %v836
    %v838 = vlaneseq
    %v839 = vshrl.u32 %v838, 7
    %v840 = vsub.s32 %v693, %v839
    %v841 = vrot.slane %v590, %v840
    %v842 = vsel %vm698, %v841, %v837
    %v843 = vlaneseq
    %v844 = vshrl.u32 %v843, 7
    %v845 = vsub.s32 %v700, %v844
    %v846 = vrot.slane %v592, %v845
    %v847 = vsel %vm705, %v846, %v842
    %v848 = vlaneseq
    %v849 = vshrl.u32 %v848, 7
    %v850 = vsub.s32 %v707, %v849
    %v851 = vrot.slane %v594, %v850
    %v852 = vsel %vm712, %v851, %v847
    %v853 = vlaneseq
    %v854 = vshrl.u32 %v853, 7
    %v855 = vsub.s32 %v714, %v854
    %v856 = vrot.slane %v596, %v855
    %v857 = vsel %vm719, %v856, %v852
    %v858 = vlaneseq
    %v859 = vshrl.u32 %v858, 7
    %v860 = vsub.s32 %v721, %v859
    %v861 = vrot.slane %v598, %v860
    %v862 = vsel %vm726, %v861, %v857
    %v863 = vlaneseq
    %v864 = vshrl.u32 %v863, 7
    %v865 = vsub.s32 %v728, %v864
    %v866 = vrot.slane %v600, %v865
    %v867 = vsel %vm733, %v866, %v862
    %v868 = vlaneseq
    %v869 = vshrl.u32 %v868, 7
    %v870 = vsub.s32 %v735, %v869
    %v871 = vrot.slane %v602, %v870
    %v872 = vsel %vm740, %v871, %v867
    %v873 = vlaneseq
    %v874 = vshrl.u32 %v873, 7
    %v875 = vsub.s32 %v742, %v874
    %v876 = vrot.slane %v604, %v875
    %v877 = vsel %vm747, %v876, %v872
    %v878 = vlaneseq
    %v879 = vshrl.u32 %v878, 7
    %v880 = vsub.s32 %v749, %v879
    %v881 = vrot.slane %v606, %v880
    %v882 = vsel %vm754, %v881, %v877
    %v883 = vlaneseq
    %v884 = vshrl.u32 %v883, 7
    %v885 = vsub.s32 %v756, %v884
    %v886 = vrot.slane %v608, %v885
    %v887 = vsel %vm761, %v886, %v882
    %v888 = vlaneseq
    %v889 = vshrl.u32 %v888, 7
    %v890 = vsub.s32 %v763, %v889
    %v891 = vrot.slane %v610, %v890
    %v892 = vsel %vm768, %v891, %v887
    %v893 = vlaneseq
    %v894 = vshrl.u32 %v893, 7
    %v895 = vsub.s32 %v770, %v894
    %v896 = vrot.slane %v612, %v895
    %v897 = vsel %vm775, %v896, %v892
    %v898 = vlaneseq
    %v899 = vshrl.u32 %v898, 7
    %v900 = vsub.s32 %v777, %v899
    %v901 = vrot.slane %v614, %v900
    %v902 = vsel %vm782, %v901, %v897
    %v903 = vlaneseq
    %v904 = vshrl.u32 %v903, 7
    %v905 = vsub.s32 %v784, %v904
    %v906 = vrot.slane %v616, %v905
    %v907 = vsel %vm789, %v906, %v902
    %v908 = vlaneseq
    %v909 = vshrl.u32 %v908, 7
    %v910 = vsub.s32 %v791, %v909
    %v911 = vrot.slane %v618, %v910
    %v912 = vsel %vm796, %v911, %v907
    %vm913 = vcmask 1042434
    %v914 = vsel %vm913, %v912, %v912
    %vm915 = vcmask 1043459
    %v916 = vsel %vm915, %v912, %v914
    %vm917 = vcmask 1044484
    %v918 = vsel %vm917, %v912, %v916
    %vm919 = vcmask 1045509
    %v920 = vsel %vm919, %v912, %v918
    %vm921 = vcmask 1046534
    %v922 = vsel %vm921, %v912, %v920
    %vm923 = vcmask 1047559
    %v924 = vsel %vm923, %v912, %v922
    %v926 = vsel %vm814, %v924, %v817
    %v943 = vlaneseq
    %v944 = vshrl.u32 %v943, 7
    %v945 = vsub.s32 %v620, %v944
    %v946 = vrot.slane %v540, %v945
    %v947 = vlaneseq
    %v948 = vshrl.u32 %v947, 7
    %v949 = vsub.s32 %v693, %v948
    %v950 = vrot.slane %v542, %v949
    %v951 = vsel %vm698, %v950, %v946
    %v952 = vlaneseq
    %v953 = vshrl.u32 %v952, 7
    %v954 = vsub.s32 %v700, %v953
    %v955 = vrot.slane %v544, %v954
    %v956 = vsel %vm705, %v955, %v951
    %v957 = vlaneseq
    %v958 = vshrl.u32 %v957, 7
    %v959 = vsub.s32 %v707, %v958
    %v960 = vrot.slane %v546, %v959
    %v961 = vsel %vm712, %v960, %v956
    %v962 = vlaneseq
    %v963 = vshrl.u32 %v962, 7
    %v964 = vsub.s32 %v714, %v963
    %v965 = vrot.slane %v548, %v964
    %v966 = vsel %vm719, %v965, %v961
    %v967 = vlaneseq
    %v968 = vshrl.u32 %v967, 7
    %v969 = vsub.s32 %v721, %v968
    %v970 = vrot.slane %v550, %v969
    %v971 = vsel %vm726, %v970, %v966
    %v972 = vlaneseq
    %v973 = vshrl.u32 %v972, 7
    %v974 = vsub.s32 %v728, %v973
    %v975 = vrot.slane %v552, %v974
    %v976 = vsel %vm733, %v975, %v971
    %v977 = vlaneseq
    %v978 = vshrl.u32 %v977, 7
    %v979 = vsub.s32 %v735, %v978
    %v980 = vrot.slane %v554, %v979
    %v981 = vsel %vm740, %v980, %v976
    %v982 = vlaneseq
    %v983 = vshrl.u32 %v982, 7
    %v984 = vsub.s32 %v742, %v983
    %v985 = vrot.slane %v556, %v984
    %v986 = vsel %vm747, %v985, %v981
    %v987 = vlaneseq
    %v988 = vshrl.u32 %v987, 7
    %v989 = vsub.s32 %v749, %v988
    %v990 = vrot.slane %v558, %v989
    %v991 = vsel %vm754, %v990, %v986
    %v992 = vlaneseq
    %v993 = vshrl.u32 %v992, 7
    %v994 = vsub.s32 %v756, %v993
    %v995 = vrot.slane %v560, %v994
    %v996 = vsel %vm761, %v995, %v991
    %v997 = vlaneseq
    %v998 = vshrl.u32 %v997, 7
    %v999 = vsub.s32 %v763, %v998
    %v1000 = vrot.slane %v562, %v999
    %v1001 = vsel %vm768, %v1000, %v996
    %v1002 = vlaneseq
    %v1003 = vshrl.u32 %v1002, 7
    %v1004 = vsub.s32 %v770, %v1003
    %v1005 = vrot.slane %v564, %v1004
    %v1006 = vsel %vm775, %v1005, %v1001
    %v1007 = vlaneseq
    %v1008 = vshrl.u32 %v1007, 7
    %v1009 = vsub.s32 %v777, %v1008
    %v1010 = vrot.slane %v566, %v1009
    %v1011 = vsel %vm782, %v1010, %v1006
    %v1012 = vlaneseq
    %v1013 = vshrl.u32 %v1012, 7
    %v1014 = vsub.s32 %v784, %v1013
    %v1015 = vrot.slane %v568, %v1014
    %v1016 = vsel %vm789, %v1015, %v1011
    %v1017 = vlaneseq
    %v1018 = vshrl.u32 %v1017, 7
    %v1019 = vsub.s32 %v791, %v1018
    %v1020 = vrot.slane %v570, %v1019
    %v1021 = vsel %vm796, %v1020, %v1016
    %v1022 = vsel %vm913, %v1021, %v1021
    %v1023 = vsel %vm915, %v1021, %v1022
    %v1024 = vsel %vm917, %v1021, %v1023
    %v1025 = vsel %vm919, %v1021, %v1024
    %v1026 = vsel %vm921, %v1021, %v1025
    %v1027 = vsel %vm923, %v1021, %v1026
    %v1029 = vsel %vm813, %v1027, %v926
    %1030 = vst [vmem:[#allocation10] sm:$0xff] %v1029
    // Predicated region
    $region34: #{tpu_custom_call.1} parent=1 // pred_check
      _
    $region35: #{tpu_custom_call.1} parent=1 // pred_check_branch
      %1032 = sbr.rel (0) target = $region37
    $region36: #{tpu_custom_call.1} parent=1 // pred_region
      %s1034 = ssub.s32 128, 128
      %1035 = vsyncadd [#allocation4], %s1034
      %s1037 = sshll.u32 [#allocation10], 4
      %s1038 = int_to_ptr.vmem [resolvable:$true] %s1037
      %1040 = dma.vmem_to_hbm [thread:$0]  %s1038, 128, %s4, [#allocation4]
    $region37: #{tpu_custom_call.1} parent=1 // pred_fallthru
      _
    // Predicated region
    $region38: #{tpu_custom_call.1} parent=1 // pred_check
      _
    $region39: #{tpu_custom_call.1} parent=1 // pred_check_branch
      %1042 = sbr.rel (0) target = $region41
    $region40: #{tpu_custom_call.1} parent=1 // pred_region
      %1043 = dma.done [#allocation4], 128
    $region41: #{tpu_custom_call.1} parent=1 // pred_fallthru
      _
    %1044 = vsyncpa [#allocation3], 1
    %1045 = vsyncpa [#allocation6], 1
    %1046 = vsyncpa [#allocation9], 1
    %1047 = vsyncpa [#allocation4], 1

</llo_original>
